<compile_context>
chip_gen: v5e
topology: v5e:2x2
jax: 0.10.0
libtpu: 0.0.40
codegen_flags: <defaults>
</compile_context>

<pallas_src>
import jax
import jax.numpy as jnp
from jax.experimental import pallas as pl
from jax.experimental.pallas import tpu as pltpu


def _round_up(x, m):
    return ((x + m - 1) // m) * m


_NICE_TM = (8, 16, 32, 64, 128, 256)


def _pick_tm(M):
    for t in _NICE_TM:
        if M <= t:
            return t
    return 256


# --------------------------------------------------------------------------
# Kernels
# --------------------------------------------------------------------------
def _linear_single_block_kernel(x_ref, wt_ref, b_ref, o_ref):
    """Whole problem in one VMEM block: o = x @ wt + b."""
    o_ref[...] = (
        jnp.dot(x_ref[...], wt_ref[...], preferred_element_type=jnp.float32)
        + b_ref[...]
    ).astype(o_ref.dtype)


def _linear_tiled_kernel_f32out(x_ref, wt_ref, b_ref, o_ref):
    """Tiled GEMM, f32 output: accumulate directly into the resident o_ref."""
    k = pl.program_id(2)

    @pl.when(k == 0)
    def _init():
        o_ref[...] = jnp.zeros_like(o_ref)

    o_ref[...] += jnp.dot(x_ref[...], wt_ref[...],
                          preferred_element_type=jnp.float32)

    @pl.when(k == pl.num_programs(2) - 1)
    def _finalize():
        o_ref[...] += b_ref[...]


def _linear_tiled_kernel_acc(x_ref, wt_ref, b_ref, o_ref, acc_ref):
    """Tiled GEMM with f32 scratch accumulator (for non-f32 output dtypes)."""
    k = pl.program_id(2)

    @pl.when(k == 0)
    def _init():
        acc_ref[...] = jnp.zeros_like(acc_ref)

    acc_ref[...] += jnp.dot(x_ref[...], wt_ref[...],
                            preferred_element_type=jnp.float32)

    @pl.when(k == pl.num_programs(2) - 1)
    def _finalize():
        o_ref[...] = (acc_ref[...] + b_ref[...]).astype(o_ref.dtype)


# --------------------------------------------------------------------------
# Host-side wrappers
# --------------------------------------------------------------------------
def prepare_linear_params(weight, bias):
    """Once-per-model: transpose + pad weight/bias to a lane-dense layout.

    weight: (N, K) in PyTorch nn.Linear layout
    bias:   (N,)
    returns wt_p: (Kp, Np) MXU-ready RHS, b_p: (1, Np)
    """
    N, K = weight.shape
    Kp = _round_up(K, 128)
    Np = _round_up(N, 128)
    wt_p = jnp.pad(weight.T, ((0, Kp - K), (0, Np - N)))
    b_p = jnp.pad(bias.reshape(1, N), ((0, 0), (0, Np - N)))
    return wt_p, b_p


def linear_forward(x, wt_p, b_p, out_dim):
    """y = x @ weight.T + bias with weight pre-transposed/padded.

    x:     (M, K)
    wt_p:  (Kp, Np)  from prepare_linear_params
    b_p:   (1,  Np)
    returns (M, out_dim)
    """
    M, K = x.shape
    Kp, Np = wt_p.shape
    assert Kp >= K and Kp % 128 == 0 and Np % 128 == 0

    # ---- Tile selection ----------------------------------------------------
    tm = _pick_tm(M)
    Mp = _round_up(M, tm)
    # 256-aligned output tiles where the shape allows (full MXU width on
    # v6e/v7x); otherwise 128.
    tn = 256 if (Np % 256 == 0 and Np >= 256) else 128
    tk = 512 if Kp % 512 == 0 else (256 if Kp % 256 == 0 else 128)

    # Pad x only if needed (avoid an extra HBM round-trip of the activations).
    if (Mp, Kp) == (M, K):
        x_p = x
    else:
        x_p = jnp.pad(x, ((0, Mp - M), (0, Kp - K)))

    # ---- Single-block fast path (covers the small test shape) --------------
    # Everything fits comfortably in VMEM: no grid, no accumulator, no
    # init/finalize branches.
    if Mp <= 256 and Np <= 512 and Kp <= 2048:
        out_p = pl.pallas_call(
            _linear_single_block_kernel,
            out_shape=jax.ShapeDtypeStruct((Mp, Np), x.dtype),
        )(x_p, wt_p, b_p)
        return out_p[:M, :out_dim]

    # ---- Tiled path ---------------------------------------------------------
    grid = (Mp // tm, Np // tn, Kp // tk)

    in_specs = [
        pl.BlockSpec((tm, tk), lambda i, j, k: (i, k)),
        pl.BlockSpec((tk, tn), lambda i, j, k: (k, j)),
        pl.BlockSpec((1, tn), lambda i, j, k: (0, j)),
    ]
    out_spec = pl.BlockSpec((tm, tn), lambda i, j, k: (i, j))

    compiler_params = pltpu.CompilerParams(
        # M / N tiles independent (megacore-shardable on v7x); K is the
        # reduction and stays sequential.
        dimension_semantics=("parallel", "parallel", "arbitrary"),
        # Tiles above (f32, double-buffered) need only a few MiB; 48 MiB keeps
        # headroom under v7x's 64 MiB/TC while allowing deeper pipelining.
        vmem_limit_bytes=48 * 1024 * 1024,
    )

    if x.dtype == jnp.float32:
        # Accumulate directly into the resident output tile: no scratch, no
        # finalize copy.
        out_p = pl.pallas_call(
            _linear_tiled_kernel_f32out,
            out_shape=jax.ShapeDtypeStruct((Mp, Np), jnp.float32),
            grid_spec=pl.GridSpec(
                grid=grid, in_specs=in_specs, out_specs=out_spec),
            compiler_params=compiler_params,
        )(x_p, wt_p, b_p)
    else:
        out_p = pl.pallas_call(
            _linear_tiled_kernel_acc,
            out_shape=jax.ShapeDtypeStruct((Mp, Np), x.dtype),
            grid_spec=pl.GridSpec(
                grid=grid, in_specs=in_specs, out_specs=out_spec,
                scratch_shapes=[pltpu.VMEM((tm, tn), jnp.float32)]),
            compiler_params=compiler_params,
        )(x_p, wt_p, b_p)

    return out_p[:M, :out_dim]


# --------------------------------------------------------------------------
# Demo / correctness check
# --------------------------------------------------------------------------
if __name__ == "__main__":
    # LinearRegression(input_dim=32, output_dim=8), batch of 4 samples.
    input_dim, output_dim, batch = 32, 8, 4

    key = jax.random.PRNGKey(0)
    kx, kw, kb = jax.random.split(key, 3)

    x = jax.random.normal(kx, (batch, input_dim), dtype=jnp.float32)
    # Deterministic init mimicking nn.Linear's uniform(-1/sqrt(K), 1/sqrt(K)).
    bound = 1.0 / jnp.sqrt(jnp.float32(input_dim))
    weight = jax.random.uniform(kw, (output_dim, input_dim),
                                minval=-bound, maxval=bound,
                                dtype=jnp.float32)
    bias = jax.random.uniform(kb, (output_dim,),
                              minval=-bound, maxval=bound,
                              dtype=jnp.float32)

    # Params prepared once (hoisted transpose + pad), reused across calls.
    wt_p, b_p = prepare_linear_params(weight, bias)

    y = linear_forward(x, wt_p, b_p, output_dim)
    jax.block_until_ready(y)

    y_ref = x @ weight.T + bias
    assert y.shape == (batch, output_dim)
    assert jnp.allclose(y, y_ref, atol=1e-5, rtol=1e-5)

    # Also exercise the tiled (multi-block, K-reduction) path once.
    M2, K2, N2 = 300, 1024, 200
    k2x, k2w, k2b = jax.random.split(jax.random.PRNGKey(1), 3)
    x2 = jax.random.normal(k2x, (M2, K2), dtype=jnp.float32)
    w2 = jax.random.normal(k2w, (N2, K2), dtype=jnp.float32) * 0.02
    b2 = jax.random.normal(k2b, (N2,), dtype=jnp.float32)
    wt2_p, b2_p = prepare_linear_params(w2, b2)
    y2 = linear_forward(x2, wt2_p, b2_p, N2)
    jax.block_until_ready(y2)
    y2_ref = x2 @ w2.T + b2
    assert y2.shape == (M2, N2)
    assert jnp.allclose(y2, y2_ref, atol=2e-4, rtol=2e-5)

    print("KERNEL_OK")
</pallas_src>

<mosaic_0001>
module attributes {stable_mosaic.version = 11 : i64} {
  func.func @_linear_single_block_kernel(%arg0: memref<8x128xf32, #tpu.memory_space<vmem>>, %arg1: memref<128x128xf32, #tpu.memory_space<vmem>>, %arg2: memref<1x128xf32, #tpu.memory_space<vmem>>, %arg3: memref<8x128xf32, #tpu.memory_space<vmem>>) attributes {dimension_semantics = [], scalar_prefetch = 0 : i64, scratch_operands = 0 : i64, tpu.core_type = #tpu.core_type<tc>} {
    %c0 = arith.constant 0 : index
    %c0_0 = arith.constant 0 : index
    %0 = vector.load %arg0[%c0, %c0_0] : memref<8x128xf32, #tpu.memory_space<vmem>>, vector<8x128xf32>
    %c0_1 = arith.constant 0 : index
    %c0_2 = arith.constant 0 : index
    %1 = vector.load %arg1[%c0_1, %c0_2] : memref<128x128xf32, #tpu.memory_space<vmem>>, vector<128x128xf32>
    %cst = arith.constant dense<0.000000e+00> : vector<8x128xf32>
    %2 = tpu.matmul %0, %1, %cst {dimension_numbers = #tpu.dot_dimension_numbers<[1], [0], [0], [1], [0, 0, 1, 1], [], []>} : vector<8x128xf32>, vector<128x128xf32>, vector<8x128xf32> -> vector<8x128xf32>
    %c0_3 = arith.constant 0 : index
    %c0_4 = arith.constant 0 : index
    %3 = vector.load %arg2[%c0_3, %c0_4] : memref<1x128xf32, #tpu.memory_space<vmem>>, vector<1x128xf32>
    %4 = vector.broadcast %3 : vector<1x128xf32> to vector<8x128xf32>
    %5 = arith.addf %2, %4 : vector<8x128xf32>
    %c0_5 = arith.constant 0 : index
    %c0_6 = arith.constant 0 : index
    %6 = vector.load %arg3[%c0_5, %c0_6] : memref<8x128xf32, #tpu.memory_space<vmem>>, vector<8x128xf32>
    tpu.vector_store %arg3[%c0_5, %c0_6], %5 {strides = array<i32>} : memref<8x128xf32, #tpu.memory_space<vmem>>, vector<8x128xf32>,
    return
  }
}

</mosaic_0001>

<llo_original>
// kernel: tpu_custom_call.1
$region0: #{tpu_custom_call.1}
  #allocation0 [shape = 'u32[]', space=smem, size = 0x4, offset = 0x4, fixed_abs, tag = 'smem constant byte address 0x4 - core index']
  #allocation1 [shape = 'u32[72,128]{1,0:T(1,128)}', space=vmem, size = 0x9000, scoped, tag = 'internal scratch']
  %s0 = inlined_call_operand.hbm [shape: f32[8,128], index: 0, kind: input, shape index: {}]
  %s1 = inlined_call_operand.hbm [shape: f32[128,128], index: 1, kind: input, shape index: {}]
  %s2 = inlined_call_operand.vmem [shape: f32[1,128], index: 2, kind: input, shape index: {}]
  %s3 = inlined_call_operand.hbm [shape: f32[8,128], index: 3, kind: output, shape index: {}]
  %s4 = sld [smem:[#allocation0]]
  $region30: #{tpu_custom_call.1} parent=0
    _
  %s6 = ssub.s32 1, %s4
  %s7 = scalar_select 0, %s6, %s4
  $region1: #{tpu_custom_call.1} parent=0
    #allocation2 [shape = 'u8[4096]{0}', space=vmem, size = 0x1000, scoped, tag = 'input window, operand 0, single buffered']
    #allocation3 [shape = 's32[1]{0}', space=sflag, size = 0x4, scoped, tag = 'scoped memory for tpu_custom_call.1']
    #allocation4 [shape = 's32[1]{0}', space=sflag, size = 0x4, scoped, tag = 'scoped memory for tpu_custom_call.1']
    #allocation5 [shape = 'u8[65536]{0}', space=vmem, size = 0x10000, scoped, tag = 'input window, operand 1, single buffered']
    #allocation6 [shape = 's32[1]{0}', space=sflag, size = 0x4, scoped, tag = 'scoped memory for tpu_custom_call.1']
    #allocation7 [shape = 'u8[4096]{0}', space=vmem, size = 0x1000, scoped, tag = 'output window, operand 0, single buffered']
    %8 = vsyncpa [#allocation3], 0
    %9 = vsyncpa [#allocation6], 0
    %10 = vsyncpa [#allocation4], 0
    // Predicated region
    $region2: #{tpu_custom_call.1} parent=1 // pred_check
      _
    $region3: #{tpu_custom_call.1} parent=1 // pred_check_branch
      %12 = sbr.rel (0) target = $region5
    $region4: #{tpu_custom_call.1} parent=1 // pred_region
      %14 = vsyncadd [#allocation3], 0
      %s16 = sshll.u32 %s0, 4
      %s17 = int_to_ptr.hbm [resolvable:$true] %s16
      %s18 = sshll.u32 [#allocation2], 4
      %s19 = int_to_ptr.vmem [resolvable:$true] %s18
      %21 = dma.hbm_to_vmem [thread:$0]  %s17, 128, %s19, [#allocation3]
    $region5: #{tpu_custom_call.1} parent=1 // pred_fallthru
      _
    // Predicated region
    $region6: #{tpu_custom_call.1} parent=1 // pred_check
      _
    $region7: #{tpu_custom_call.1} parent=1 // pred_check_branch
      %23 = sbr.rel (0) target = $region9
    $region8: #{tpu_custom_call.1} parent=1 // pred_region
      %25 = vsyncadd [#allocation6], 0
      %s26 = sshll.u32 %s1, 4
      %s27 = int_to_ptr.hbm [resolvable:$true] %s26
      %s28 = sshll.u32 [#allocation5], 4
      %s29 = int_to_ptr.vmem [resolvable:$true] %s28
      %34 = dma.hbm_to_vmem [thread:$0]  %s27, 2048, %s29, [#allocation6], 128, 128, 8
    $region9: #{tpu_custom_call.1} parent=1 // pred_fallthru
      _
    // Predicated region
    $region10: #{tpu_custom_call.1} parent=1 // pred_check
      _
    $region11: #{tpu_custom_call.1} parent=1 // pred_check_branch
      %36 = sbr.rel (0) target = $region13
    $region12: #{tpu_custom_call.1} parent=1 // pred_region
      _
    $region13: #{tpu_custom_call.1} parent=1 // pred_fallthru
      _
    // Predicated region
    $region14: #{tpu_custom_call.1} parent=1 // pred_check
      _
    $region15: #{tpu_custom_call.1} parent=1 // pred_check_branch
      %38 = sbr.rel (0) target = $region17
    $region16: #{tpu_custom_call.1} parent=1 // pred_region
      %40 = dma.done [#allocation3], 128
    $region17: #{tpu_custom_call.1} parent=1 // pred_fallthru
      _
    // Predicated region
    $region18: #{tpu_custom_call.1} parent=1 // pred_check
      _
    $region19: #{tpu_custom_call.1} parent=1 // pred_check_branch
      %42 = sbr.rel (0) target = $region21
    $region20: #{tpu_custom_call.1} parent=1 // pred_region
      %44 = dma.done [#allocation6], 2048
    $region21: #{tpu_custom_call.1} parent=1 // pred_fallthru
      _
    %v45 = vld [vmem:[#allocation2] sm:$0xff]
    %v46 = vld [vmem:[#allocation5] sm:$0xff]
    %v47 = vld [vmem:[#allocation5 + $0x8] sm:$0xff]
    %v48 = vld [vmem:[#allocation5 + $0x10] sm:$0xff]
    %v49 = vld [vmem:[#allocation5 + $0x18] sm:$0xff]
    %v50 = vld [vmem:[#allocation5 + $0x20] sm:$0xff]
    %v51 = vld [vmem:[#allocation5 + $0x28] sm:$0xff]
    %v52 = vld [vmem:[#allocation5 + $0x30] sm:$0xff]
    %v53 = vld [vmem:[#allocation5 + $0x38] sm:$0xff]
    %v54 = vld [vmem:[#allocation5 + $0x40] sm:$0xff]
    %v55 = vld [vmem:[#allocation5 + $0x48] sm:$0xff]
    %v56 = vld [vmem:[#allocation5 + $0x50] sm:$0xff]
    %v57 = vld [vmem:[#allocation5 + $0x58] sm:$0xff]
    %v58 = vld [vmem:[#allocation5 + $0x60] sm:$0xff]
    %v59 = vld [vmem:[#allocation5 + $0x68] sm:$0xff]
    %v60 = vld [vmem:[#allocation5 + $0x70] sm:$0xff]
    %v61 = vld [vmem:[#allocation5 + $0x78] sm:$0xff]
    %v62 = vld [vmem:[%s2] sm:$0x1]
    %v64 = vperm.slane %v62, 0
    %66 = vmatpush.msra.mxu0 %v61
    %67 = vmatpush.msra.mxu0 %v60
    %68 = vmatpush.msra.mxu0 %v59
    %69 = vmatpush.msra.mxu0 %v58
    %70 = vmatpush.msra.mxu0 %v57
    %71 = vmatpush.msra.mxu0 %v56
    %72 = vmatpush.msra.mxu0 %v55
    %73 = vmatpush.msra.mxu0 %v54
    %74 = vmatpush.msra.mxu0 %v53
    %75 = vmatpush.msra.mxu0 %v52
    %76 = vmatpush.msra.mxu0 %v51
    %77 = vmatpush.msra.mxu0 %v50
    %78 = vmatpush.msra.mxu0 %v49
    %79 = vmatpush.msra.mxu0 %v48
    %80 = vmatpush.msra.mxu0 %v47
    %81 = vmatpush.msra.mxu0 %v46
    %82 = vmatmul.f32.gmra.mxu0 %v45
    %v83 = vpop.f32.mrf.mxu0
    %v84 = vadd.f32 %v64, %v83
    %85 = vdwg.mxu0
    %86 = vst [vmem:[#allocation7] sm:$0xff] %v84
    // Predicated region
    $region22: #{tpu_custom_call.1} parent=1 // pred_check
      _
    $region23: #{tpu_custom_call.1} parent=1 // pred_check_branch
      %88 = sbr.rel (0) target = $region25
    $region24: #{tpu_custom_call.1} parent=1 // pred_region
      %90 = vsyncadd [#allocation4], 0
      %s92 = sshll.u32 [#allocation7], 4
      %s93 = int_to_ptr.vmem [resolvable:$true] %s92
      %s94 = sshll.u32 %s3, 4
      %s95 = int_to_ptr.hbm [resolvable:$true] %s94
      %97 = dma.vmem_to_hbm [thread:$0]  %s93, 128, %s95, [#allocation4]
    $region25: #{tpu_custom_call.1} parent=1 // pred_fallthru
      _
    // Predicated region
    $region26: #{tpu_custom_call.1} parent=1 // pred_check
      _
    $region27: #{tpu_custom_call.1} parent=1 // pred_check_branch
      %99 = sbr.rel (0) target = $region29
    $region28: #{tpu_custom_call.1} parent=1 // pred_region
      %101 = dma.done [#allocation4], 128
    $region29: #{tpu_custom_call.1} parent=1 // pred_fallthru
      _
    %102 = vsyncpa [#allocation3], 1
    %103 = vsyncpa [#allocation6], 1
    %104 = vsyncpa [#allocation4], 1

</llo_original>
